<compile_context>
chip_gen: v7x
topology: tpu7x:2x2x1
jax: 0.10.0
libtpu: 0.0.40
codegen_flags: <defaults>
</compile_context>

<pallas_src>
import functools
import math

import jax
import jax.numpy as jnp
from jax.experimental import pallas as pl
from jax.experimental.pallas import tpu as pltpu

BIFPN_EPS = 1e-4  # matches the PyTorch module's self.epsilon

# Dtype-aware sublane multiple (packed sub-32-bit rows need whole native tiles).
_SUBLANE = {4: 8, 2: 16, 1: 32}


# ------------------------------ budgets / tiling ------------------------------
def _select_budgets():
    """(max_block_bytes, vmem_limit_bytes) chosen per TPU generation."""
    vmem_cap = None
    try:
        vmem_cap = int(pltpu.get_tpu_info().vmem_capacity_bytes)
    except Exception:
        vmem_cap = None
    if vmem_cap is None or vmem_cap <= (64 << 20):
        # v7x-class (64 MiB VMEM/TC) or unknown: 3 arrays x 2 bufs x 4 MiB = 24 MiB.
        return 4 << 20, 48 << 20
    # v5e / v6e (128 MiB VMEM): 3 x 2 x 8 MiB = 48 MiB pipeline.
    return 8 << 20, 64 << 20


def _divisors(m):
    out = []
    i = 1
    while i * i <= m:
        if m % i == 0:
            out.append(i)
            if i != m // i:
                out.append(m // i)
        i += 1
    return out


def _pick_row_tile(r0, r1, sub, lane_bytes, cap):
    """Largest rb with rb | gcd(r0, r1), rb % sub == 0, rb*lane_bytes <= cap."""
    rg = math.gcd(r0, r1)
    if rg % sub != 0:
        return None
    if sub * lane_bytes > cap:
        return None
    m = rg // sub
    cap_d = max(1, cap // (sub * lane_bytes))
    best = 1
    for d in _divisors(m):
        if d <= cap_d and d > best:
            best = d
    return sub * best


def _pick_flat_view(f0, f1, itemsize, sub, cap):
    """Best (lane, rb) for the flat (N, rows, lane) view; None if impossible.

    lane | gcd(f0, f1), lane % 128 == 0; rb | f_i//lane for both inputs,
    rb % sub == 0; maximizes rb*lane*itemsize under `cap`.
    """
    g = math.gcd(f0, f1)
    if g % 128 != 0:
        return None
    best = None  # (bytes, lane, rb)
    for d in _divisors(g // 128):
        lane = 128 * d
        rb = _pick_row_tile(f0 // lane, f1 // lane, sub, lane * itemsize, cap)
        if rb is None:
            continue
        b = rb * lane * itemsize
        if best is None or (b, lane) > (best[0], best[1]):
            best = (b, lane, rb)
    if best is None:
        return None
    return best[1], best[2]


# ----------------------------------- kernel -----------------------------------
def _concat2_kernel(t0, eps, w_ref, x0_ref, x1_ref, o_ref):
    """Grid step t < t0 scales+copies an x0 tile, t >= t0 an x1 tile.

    w_ref is the (2,) BiFPN weight in SMEM (scalar prefetch); the fast
    normalization w / (sum(w) + eps) is done here with scalar math.
    """
    t = pl.program_id(1)
    denom = w_ref[0] + w_ref[1] + eps

    @pl.when(t < t0)                                   # x0 region of the output
    def _():
        o_ref[...] = ((w_ref[0] / denom) * x0_ref[...]).astype(o_ref.dtype)

    @pl.when(t >= t0)                                  # x1 region of the output
    def _():
        o_ref[...] = ((w_ref[1] / denom) * x1_ref[...]).astype(o_ref.dtype)


def _launch(wv, x0v, x1v, out_sds, blk, t0, t1, eps, vmem_limit, cost):
    """Shared pallas_call builder: identical block shape for x0 / x1 / out."""
    n = x0v.shape[0]
    zeros = (0,) * (len(blk) - 2)

    # Clamp the unused input's block index so Pallas skips its re-fetch
    # (DMA is elided when the block index repeats across steps).
    def in0_map(b, t, w_s, _t0=t0, _z=zeros):
        return (b, jnp.minimum(t, _t0 - 1)) + _z

    def in1_map(b, t, w_s, _t0=t0, _z=zeros):
        return (b, jnp.maximum(t - _t0, 0)) + _z

    def out_map(b, t, w_s, _z=zeros):
        return (b, t) + _z

    return pl.pallas_call(
        functools.partial(_concat2_kernel, t0, eps),
        out_shape=out_sds,
        grid_spec=pltpu.PrefetchScalarGridSpec(
            num_scalar_prefetch=1,                     # w lands in SMEM
            grid=(n, t0 + t1),
            in_specs=[pl.BlockSpec(blk, in0_map),
                      pl.BlockSpec(blk, in1_map)],
            out_specs=pl.BlockSpec(blk, out_map),
        ),
        compiler_params=pltpu.CompilerParams(
            dimension_semantics=("parallel", "parallel"),
            vmem_limit_bytes=vmem_limit,
        ),
        cost_estimate=cost,
    )(wv, x0v, x1v)


# --------------------------------- entry point ---------------------------------
def bifpn_concat2(x0, x1, w, *, eps=BIFPN_EPS):
    """Pallas TPU implementation of BiFPN_Concat2.forward([x0, x1]) with dim=1."""
    assert x0.ndim == 4 and x1.ndim == 4, "expects NCHW tensors"
    n, c0, h, wd = x0.shape
    n1, c1, h1, w1 = x1.shape
    assert (n, h, wd) == (n1, h1, w1), "inputs must agree on N, H, W"

    dtype = jnp.result_type(x0.dtype, x1.dtype)
    x0 = x0.astype(dtype)
    x1 = x1.astype(dtype)
    wv = w.astype(jnp.float32)

    itemsize = jnp.dtype(dtype).itemsize
    sub = _SUBLANE.get(itemsize, 8)
    f0, f1 = c0 * h * wd, c1 * h * wd
    hw = h * wd

    max_block_bytes, vmem_limit = _select_budgets()
    total_bytes = n * (f0 + f1) * itemsize
    # Keep >= ~8 grid steps so enlarged blocks never starve a 2-TC (v7x) chip,
    # but never shrink below 64 KiB (overhead is negligible at small totals).
    cap = min(max_block_bytes, max(64 * 1024, total_bytes // 8))

    cost = pl.CostEstimate(flops=n * (f0 + f1), transcendentals=0,
                           bytes_accessed=2 * total_bytes)

    # Path 1 (preferred): flat (N, rows, lane) view with a 128-multiple lane.
    flat = _pick_flat_view(f0, f1, itemsize, sub, cap)
    if flat is not None:
        lane, rb = flat
        r0, r1 = f0 // lane, f1 // lane
        out = _launch(
            wv,
            x0.reshape(n, r0, lane),                   # free row-major reshapes
            x1.reshape(n, r1, lane),
            jax.ShapeDtypeStruct((n, r0 + r1, lane), dtype),
            (1, rb, lane), r0 // rb, r1 // rb, eps, vmem_limit, cost)
        return out.reshape(n, c0 + c1, h, wd)

    # Path 2: channel-tiled (N, C, H*W) view; last dim full => lane-dense stores.
    rb = _pick_row_tile(c0, c1, sub, hw * itemsize, cap)
    if rb is not None:
        out = _launch(
            wv,
            x0.reshape(n, c0, hw),
            x1.reshape(n, c1, hw),
            jax.ShapeDtypeStruct((n, c0 + c1, hw), dtype),
            (1, rb, hw), c0 // rb, c1 // rb, eps, vmem_limit, cost)
        return out.reshape(n, c0 + c1, h, wd)

    # Path 3: last-ditch (1, cb, H, W) blocks with full (H, W) -- always legal.
    cg = math.gcd(c0, c1)
    cb = 1
    for d in _divisors(cg):
        if d * hw * itemsize <= cap and d > cb:
            cb = d
    return _launch(
        wv, x0, x1,
        jax.ShapeDtypeStruct((n, c0 + c1, h, wd), dtype),
        (1, cb, h, wd), c0 // cb, c1 // cb, eps, vmem_limit, cost)


# ------------------------------------ demo ------------------------------------
def _reference(x0, x1, w, eps=BIFPN_EPS):
    wn = w / (jnp.sum(w) + eps)
    return jnp.concatenate([wn[0] * x0, wn[1] * x1], axis=1)


if __name__ == "__main__":
    key = jax.random.PRNGKey(0)
    k0, k1, k2, k3 = jax.random.split(key, 4)
    run = jax.jit(bifpn_concat2)

    # Test 1: the canonical small BiFPN case (equal channel counts).
    x0 = jax.random.normal(k0, (2, 4, 16, 16), jnp.float32)
    x1 = jax.random.normal(k1, (2, 4, 16, 16), jnp.float32)
    w = jnp.ones((2,), jnp.float32)                    # nn.Parameter(torch.ones(2))
    out = jax.block_until_ready(run(x0, x1, w))
    assert out.shape == (2, 8, 16, 16) and out.dtype == jnp.float32
    assert bool(jnp.allclose(out, _reference(x0, x1, w), rtol=1e-6, atol=1e-6))

    # Test 2: asymmetric channel counts + non-uniform weights (flat-view path).
    x0b = jax.random.normal(k2, (2, 4, 16, 16), jnp.float32)
    x1b = jax.random.normal(k3, (2, 8, 16, 16), jnp.float32)
    wb = jnp.array([0.7, 1.3], jnp.float32)
    outb = jax.block_until_ready(run(x0b, x1b, wb))
    assert outb.shape == (2, 12, 16, 16)
    assert bool(jnp.allclose(outb, _reference(x0b, x1b, wb), rtol=1e-6, atol=1e-6))

    # Test 3: awkward odd spatial dims (exercises the full-(H, W) fallback path).
    x0c = jax.random.normal(k0, (1, 3, 7, 9), jnp.float32)
    x1c = jax.random.normal(k1, (1, 6, 7, 9), jnp.float32)
    outc = jax.block_until_ready(run(x0c, x1c, wb))
    assert outc.shape == (1, 9, 7, 9)
    assert bool(jnp.allclose(outc, _reference(x0c, x1c, wb), rtol=1e-6, atol=1e-6))

    print("KERNEL_OK")
</pallas_src>

<mosaic_0001>
module attributes {stable_mosaic.version = 11 : i64} {
  func.func @_concat2_kernel(%arg0: i32, %arg1: i32, %arg2: memref<2xf32, #tpu.memory_space<smem>>, %arg3: memref<1x8x128xf32, #tpu.memory_space<vmem>>, %arg4: memref<1x8x128xf32, #tpu.memory_space<vmem>>, %arg5: memref<1x8x128xf32, #tpu.memory_space<vmem>>) attributes {dimension_semantics = [#tpu.dimension_semantics<parallel>, #tpu.dimension_semantics<parallel>], iteration_bounds = array<i64: 2, 2>, scalar_prefetch = 1 : i64, scratch_operands = 0 : i64, tpu.core_type = #tpu.core_type<tc>, window_params = [{transform_indices = @transform_0, window_bounds = array<i64: 1, 8, 128>}, {transform_indices = @transform_1, window_bounds = array<i64: 1, 8, 128>}, {transform_indices = @transform_2, window_bounds = array<i64: 1, 8, 128>}]} {
    %c0 = arith.constant 0 : index
    %0 = memref.load %arg2[%c0] : memref<2xf32, #tpu.memory_space<smem>>
    %c1 = arith.constant 1 : index
    %1 = memref.load %arg2[%c1] : memref<2xf32, #tpu.memory_space<smem>>
    %2 = arith.addf %0, %1 : f32
    %cst = arith.constant 9.99999974E-5 : f32
    %3 = arith.addf %2, %cst : f32
    %c1_i32 = arith.constant 1 : i32
    %4 = arith.cmpi slt, %arg1, %c1_i32 : i32
    %5 = arith.extui %4 : i1 to i32
    %c0_i32 = arith.constant 0 : i32
    %6 = arith.cmpi ne, %5, %c0_i32 : i32
    scf.if %6 {
      %c0_2 = arith.constant 0 : index
      %10 = memref.load %arg2[%c0_2] : memref<2xf32, #tpu.memory_space<smem>>
      %11 = arith.divf %10, %3 : f32
      %c0_3 = arith.constant 0 : index
      %c0_4 = arith.constant 0 : index
      %c0_5 = arith.constant 0 : index
      %12 = vector.load %arg3[%c0_3, %c0_4, %c0_5] : memref<1x8x128xf32, #tpu.memory_space<vmem>>, vector<1x8x128xf32>
      %13 = vector.broadcast %11 : f32 to vector<1x8x128xf32>
      %14 = arith.mulf %13, %12 : vector<1x8x128xf32>
      %c0_6 = arith.constant 0 : index
      %c0_7 = arith.constant 0 : index
      %c0_8 = arith.constant 0 : index
      %15 = vector.load %arg5[%c0_6, %c0_7, %c0_8] : memref<1x8x128xf32, #tpu.memory_space<vmem>>, vector<1x8x128xf32>
      tpu.vector_store %arg5[%c0_6, %c0_7, %c0_8], %14 {strides = array<i32>} : memref<1x8x128xf32, #tpu.memory_space<vmem>>, vector<1x8x128xf32>,
    } else {
    }
    %c1_i32_0 = arith.constant 1 : i32
    %7 = arith.cmpi sge, %arg1, %c1_i32_0 : i32
    %8 = arith.extui %7 : i1 to i32
    %c0_i32_1 = arith.constant 0 : i32
    %9 = arith.cmpi ne, %8, %c0_i32_1 : i32
    scf.if %9 {
      %c1_2 = arith.constant 1 : index
      %10 = memref.load %arg2[%c1_2] : memref<2xf32, #tpu.memory_space<smem>>
      %11 = arith.divf %10, %3 : f32
      %c0_3 = arith.constant 0 : index
      %c0_4 = arith.constant 0 : index
      %c0_5 = arith.constant 0 : index
      %12 = vector.load %arg4[%c0_3, %c0_4, %c0_5] : memref<1x8x128xf32, #tpu.memory_space<vmem>>, vector<1x8x128xf32>
      %13 = vector.broadcast %11 : f32 to vector<1x8x128xf32>
      %14 = arith.mulf %13, %12 : vector<1x8x128xf32>
      %c0_6 = arith.constant 0 : index
      %c0_7 = arith.constant 0 : index
      %c0_8 = arith.constant 0 : index
      %15 = vector.load %arg5[%c0_6, %c0_7, %c0_8] : memref<1x8x128xf32, #tpu.memory_space<vmem>>, vector<1x8x128xf32>
      tpu.vector_store %arg5[%c0_6, %c0_7, %c0_8], %14 {strides = array<i32>} : memref<1x8x128xf32, #tpu.memory_space<vmem>>, vector<1x8x128xf32>,
    } else {
    }
    return
  }
  func.func @transform_0(%arg0: i32, %arg1: i32, %arg2: memref<2xf32, #tpu.memory_space<smem>>) -> (i32, i32, i32) {
    %c0_i32 = arith.constant 0 : i32
    %0 = arith.minsi %arg1, %c0_i32 : i32
    %c0_i32_0 = arith.constant 0 : i32
    %c0_i32_1 = arith.constant 0 : i32
    return %arg0, %0, %c0_i32_0 : i32, i32, i32
  }
  func.func @transform_1(%arg0: i32, %arg1: i32, %arg2: memref<2xf32, #tpu.memory_space<smem>>) -> (i32, i32, i32) {
    %c1_i32 = arith.constant 1 : i32
    %0 = arith.subi %arg1, %c1_i32 : i32
    %c0_i32 = arith.constant 0 : i32
    %1 = arith.maxsi %0, %c0_i32 : i32
    %c0_i32_0 = arith.constant 0 : i32
    %c0_i32_1 = arith.constant 0 : i32
    return %arg0, %1, %c0_i32_0 : i32, i32, i32
  }
  func.func @transform_2(%arg0: i32, %arg1: i32, %arg2: memref<2xf32, #tpu.memory_space<smem>>) -> (i32, i32, i32) {
    %c0_i32 = arith.constant 0 : i32
    %c0_i32_0 = arith.constant 0 : i32
    return %arg0, %arg1, %c0_i32 : i32, i32, i32
  }
}

</mosaic_0001>

<llo_original>
// kernel: bifpn_concat2.1
$region0: #{bifpn_concat2.1}
  #allocation0 [shape = 'u32[]', space=smem, size = 0x4, offset = 0x4, fixed_abs, tag = 'smem constant byte address 0x4 - core index']
  #allocation1 [shape = 'u32[144,128]{1,0:T(1,128)}', space=vmem, size = 0x12000, scoped, tag = 'internal scratch']
  #allocation2 [shape = 's32[1]{0}', space=sflag, size = 0x4, scoped, tag = 'scoped memory for bifpn_concat2.1']
  #allocation3 [shape = 'u8[512]{0}', space=smem, size = 0x200, scoped, tag = 'prefetched SMEM operand 0']
  %s0 = inlined_call_operand.vmem [shape: f32[2], index: 0, kind: input, shape index: {}]
  %s1 = inlined_call_operand.vmem [shape: f32[2,8,128], index: 1, kind: input, shape index: {}]
  %s2 = inlined_call_operand.vmem [shape: f32[2,8,128], index: 2, kind: input, shape index: {}]
  %s3 = inlined_call_operand.vmem [shape: f32[2,16,128], index: 3, kind: output, shape index: {}]
  %s4 = sld [smem:[#allocation0]]
  $region49: #{bifpn_concat2.1} parent=0
    _
  %s6 = ssub.s32 1, %s4
  %s7 = scalar_select 0, %s6, %s4
  %s8 = sshll.u32 %s0, 4
  %s9 = int_to_ptr.vmem [resolvable:$true] %s8
  %11 = dma.vmem_to_smem %s9, 16, [#allocation3], [#allocation2]
  %12 = dma.done [#allocation2], 16
  %13 = sfence
  loop: start=0, step=1, limit=6
  $region2: #{bifpn_concat2.1} parent=0 // loop_pre_header
    _
  $region3: #{bifpn_concat2.1} parent=0 // loop_header
    %s15 = sphi 0, %s19
    %p16 = scmp.ge.s32.totalorder %s15, 6
    %s22 = sphi 0, %s34
    %s23 = sphi 0, %s30
    %s24 = sphi 0, %s22
    %s25 = sphi 0, %s23
    %s26 = sphi 0, %s24
    %s27 = sphi 0, %s25
    %s43 = sphi 0, %s45
    %s46 = sphi 0, %s43
    %s47 = sphi 0, %s46
    %s63 = sphi 0, %s47
    %s77 = sphi 0, %s79
    %s80 = sphi 0, %s77
    %s81 = sphi 0, %s80
    %s97 = sphi 0, %s81
    %s105 = sphi 0, %s107
    %s108 = sphi 0, %s105
    %s109 = sphi 0, %s108
    %s125 = sphi 0, %s109
  $region4: #{bifpn_concat2.1} parent=0 // loop_header_branch
    %18 = sbr.rel (%p16) target = $region8
  $region5: #{bifpn_concat2.1} parent=0 // loop_body
    %s20 = ssub.s32 %s15, 1
    %s21 = ssub.s32 %s15, 2
    %s28 = sadd.s32 1, %s23
    %p29 = scmp.ge.s32.totalorder %s28, 2
    %s30 = scalar_select %p29, 0, %s28
    %s31 = sadd.s32 1, %s22
    %s32 = scalar_select %p29, %s31, %s22
    %p33 = scmp.ge.s32.totalorder %s32, 2
    %s34 = scalar_select %p33, 0, %s32
    %p35 = scmp.lt.s32.totalorder %s23, 0
    %s36 = scalar_select %p35, %s23, 0
    %p37 = scmp.lt.s32.totalorder %s30, 0
    %s38 = scalar_select %p37, %s30, 0
    %s39 = ssub.s32 %s22, %s34
    %s40 = ssub.s32 %s36, %s38
    %s41 = sor.u32 %s39, %s40
    %p42 = scmp.eq.s32.totalorder %s41, 0
    %s44 = sadd.s32 %s43, 1
    %s45 = scalar_select %p42, %s43, %s44
    %p48 = pneg %p42
    %p49 = scmp.eq.s32.totalorder %s15, 3
    %p50 = por %p48, %p49
    %p51 = scmp.ne.s32.totalorder %s43, %s46
    %p52 = scmp.eq.s32.totalorder %s15, 0
    %p53 = por %p51, %p52
    %p54 = scmp.ne.s32.totalorder %s43, %s46
    %p55 = scmp.eq.s32.totalorder %s20, 3
    %p56 = por %p54, %p55
    %p57 = scmp.ne.s32.totalorder %s46, %s47
    %p58 = scmp.eq.s32.totalorder %s20, 0
    %p59 = por %p57, %p58
    %p60 = scmp.ne.s32.totalorder %s46, %s47
    %p61 = scmp.eq.s32.totalorder %s21, 3
    %p62 = por %p60, %p61
    %p64 = scmp.ne.s32.totalorder %s47, %s63
    %p65 = scmp.eq.s32.totalorder %s21, 0
    %p66 = por %p64, %p65
    %s67 = ssub.s32 %s23, 1
    %p68 = scmp.gt.s32.totalorder %s67, 0
    %s69 = scalar_select %p68, %s67, 0
    %s70 = ssub.s32 %s30, 1
    %p71 = scmp.gt.s32.totalorder %s70, 0
    %s72 = scalar_select %p71, %s70, 0
    %s73 = ssub.s32 %s22, %s34
    %s74 = ssub.s32 %s69, %s72
    %s75 = sor.u32 %s73, %s74
    %p76 = scmp.eq.s32.totalorder %s75, 0
    %s78 = sadd.s32 %s77, 1
    %s79 = scalar_select %p76, %s77, %s78
    %p82 = pneg %p76
    %p83 = scmp.eq.s32.totalorder %s15, 3
    %p84 = por %p82, %p83
    %p85 = scmp.ne.s32.totalorder %s77, %s80
    %p86 = scmp.eq.s32.totalorder %s15, 0
    %p87 = por %p85, %p86
    %p88 = scmp.ne.s32.totalorder %s77, %s80
    %p89 = scmp.eq.s32.totalorder %s20, 3
    %p90 = por %p88, %p89
    %p91 = scmp.ne.s32.totalorder %s80, %s81
    %p92 = scmp.eq.s32.totalorder %s20, 0
    %p93 = por %p91, %p92
    %p94 = scmp.ne.s32.totalorder %s80, %s81
    %p95 = scmp.eq.s32.totalorder %s21, 3
    %p96 = por %p94, %p95
    %p98 = scmp.ne.s32.totalorder %s81, %s97
    %p99 = scmp.eq.s32.totalorder %s21, 0
    %p100 = por %p98, %p99
    %s101 = ssub.s32 %s22, %s34
    %s102 = ssub.s32 %s23, %s30
    %s103 = sor.u32 %s101, %s102
    %p104 = scmp.eq.s32.totalorder %s103, 0
    %s106 = sadd.s32 %s105, 1
    %s107 = scalar_select %p104, %s105, %s106
    %p110 = pneg %p104
    %p111 = scmp.eq.s32.totalorder %s15, 3
    %p112 = por %p110, %p111
    %p113 = scmp.ne.s32.totalorder %s105, %s108
    %p114 = scmp.eq.s32.totalorder %s15, 0
    %p115 = por %p113, %p114
    %p116 = scmp.ne.s32.totalorder %s105, %s108
    %p117 = scmp.eq.s32.totalorder %s20, 3
    %p118 = por %p116, %p117
    %p119 = scmp.ne.s32.totalorder %s108, %s109
    %p120 = scmp.eq.s32.totalorder %s20, 0
    %p121 = por %p119, %p120
    %p122 = scmp.ne.s32.totalorder %s108, %s109
    %p123 = scmp.eq.s32.totalorder %s21, 3
    %p124 = por %p122, %p123
    %p126 = scmp.ne.s32.totalorder %s109, %s125
    %p127 = scmp.eq.s32.totalorder %s21, 0
    %p128 = por %p126, %p127
    %p129 = scmp.le.s32.totalorder 1, %s15
    %p130 = scmp.lt.s32.totalorder %s15, 5
    %p131 = pnand %p129, %p130
    %p132 = pneg %p131
    // Predicated region
    $region9: #{bifpn_concat2.1} parent=5 // pred_check
      _
    $region10: #{bifpn_concat2.1} parent=5 // pred_check_branch
      %134 = sbr.rel (%p131) target = $region12
    $region11: #{bifpn_concat2.1} parent=5 // pred_region
      %s135 = ssub.s32 %s15, 1
    $region12: #{bifpn_concat2.1} parent=5 // pred_fallthru
      _
    %p136 = scmp.lt.s32.totalorder %s15, 4
    // Predicated region
    $region13: #{bifpn_concat2.1} parent=5 // pred_check
      %p137 = pneg %p136
    $region14: #{bifpn_concat2.1} parent=5 // pred_check_branch
      %139 = sbr.rel (%p137) target = $region16
    $region15: #{bifpn_concat2.1} parent=5 // pred_region
      // Predicated region
      $region17: #{bifpn_concat2.1} parent=15 // pred_check
        %p140 = pneg %p53
      $region18: #{bifpn_concat2.1} parent=15 // pred_check_branch
        %142 = sbr.rel (%p140) target = $region20
      $region19: #{bifpn_concat2.1} parent=15 // pred_region
        %p143 = scmp.lt.s32.totalorder %s23, 0
        %s144 = scalar_select %p143, %s23, 0
        %p145 = scmp.lt.s32.totalorder %s22, 1
        %s146 = scalar_select %p145, %s22, 1
        %p147 = scmp.lt.s32.totalorder %s144, 0
        %s148 = scalar_select %p147, %s144, 0
        %s149 = sadd.s32 %s148, %s146
        %s150 = smul.addr %s149, 8
        %s151 = scalar_lea.vmem %s1, %s150
        %p152 = scmp.lt.s32.totalorder %s23, 0
        %s153 = scalar_select %p152, %s23, 0
      $region20: #{bifpn_concat2.1} parent=15 // pred_fallthru
        _
      // Predicated region
      $region21: #{bifpn_concat2.1} parent=15 // pred_check
        %p154 = pneg %p87
      $region22: #{bifpn_concat2.1} parent=15 // pred_check_branch
        %156 = sbr.rel (%p154) target = $region24
      $region23: #{bifpn_concat2.1} parent=15 // pred_region
        %s157 = ssub.s32 %s23, 1
        %p158 = scmp.gt.s32.totalorder %s157, 0
        %s159 = scalar_select %p158, %s157, 0
        %p160 = scmp.lt.s32.totalorder %s22, 1
        %s161 = scalar_select %p160, %s22, 1
        %p162 = scmp.lt.s32.totalorder %s159, 0
        %s163 = scalar_select %p162, %s159, 0
        %s164 = sadd.s32 %s163, %s161
        %s165 = smul.addr %s164, 8
        %s166 = scalar_lea.vmem %s2, %s165
        %s167 = ssub.s32 %s23, 1
        %p168 = scmp.gt.s32.totalorder %s167, 0
        %s169 = scalar_select %p168, %s167, 0
      $region24: #{bifpn_concat2.1} parent=15 // pred_fallthru
        _
    $region16: #{bifpn_concat2.1} parent=5 // pred_fallthru
      _
    %p170 = scmp.le.s32.totalorder 1, %s15
    %p171 = scmp.lt.s32.totalorder %s15, 5
    %p172 = pnand %p170, %p171
    %p173 = pneg %p172
    // Predicated region
    $region25: #{bifpn_concat2.1} parent=5 // pred_check
      _
    $region26: #{bifpn_concat2.1} parent=5 // pred_check_branch
      %175 = sbr.rel (%p172) target = $region28
    $region27: #{bifpn_concat2.1} parent=5 // pred_region
      %s176 = ssub.s32 %s15, 1
      %p177 = scmp.lt.s32.totalorder %s25, 0
      %s178 = scalar_select %p177, %s25, 0
      %p179 = scmp.lt.s32.totalorder %s24, 1
      %s180 = scalar_select %p179, %s24, 1
      %p181 = scmp.lt.s32.totalorder %s178, 0
      %s182 = scalar_select %p181, %s178, 0
      %s183 = sadd.s32 %s182, %s180
      %s184 = smul.addr %s183, 8
      %s185 = scalar_lea.vmem %s1, %s184
      %p186 = pneg %p59
      %p187 = pneg %p56
      %s188 = ssub.s32 %s25, 1
      %p189 = scmp.gt.s32.totalorder %s188, 0
      %s190 = scalar_select %p189, %s188, 0
      %p191 = scmp.lt.s32.totalorder %s24, 1
      %s192 = scalar_select %p191, %s24, 1
      %p193 = scmp.lt.s32.totalorder %s190, 0
      %s194 = scalar_select %p193, %s190, 0
      %s195 = sadd.s32 %s194, %s192
      %s196 = smul.addr %s195, 8
      %s197 = scalar_lea.vmem %s2, %s196
      %p198 = pneg %p93
      %p199 = pneg %p90
      %p200 = pneg %p121
      %p201 = pneg %p118
      %p202 = scmp.lt.s32.totalorder %s24, 1
      %s203 = scalar_select %p202, %s24, 1
      %p204 = scmp.lt.s32.totalorder %s25, 1
      %s205 = scalar_select %p204, %s25, 1
      %s206 = smul.addr %s203, 2
      %s207 = sadd.s32 %s205, %s206
      %s208 = smul.addr %s207, 8
      %s209 = scalar_lea.vmem %s3, %s208
      %p210 = scmp.lt.s32.totalorder %s25, 0
      %s211 = scalar_select %p210, %s25, 0
      %p212 = scmp.lt.s32.totalorder %s24, 1
      %s213 = scalar_select %p212, %s24, 1
      %p214 = scmp.lt.s32.totalorder %s211, 0
      %s215 = scalar_select %p214, %s211, 0
      %s216 = sadd.s32 %s215, %s213
      %s217 = smul.addr %s216, 8
      %s218 = scalar_lea.vmem %s1, %s217
      %p219 = scmp.lt.s32.totalorder %s25, 0
      %s220 = scalar_select %p219, %s25, 0
      %s221 = ssub.s32 %s25, 1
      %p222 = scmp.gt.s32.totalorder %s221, 0
      %s223 = scalar_select %p222, %s221, 0
      %p224 = scmp.lt.s32.totalorder %s24, 1
      %s225 = scalar_select %p224, %s24, 1
      %p226 = scmp.lt.s32.totalorder %s223, 0
      %s227 = scalar_select %p226, %s223, 0
      %s228 = sadd.s32 %s227, %s225
      %s229 = smul.addr %s228, 8
      %s230 = scalar_lea.vmem %s2, %s229
      %s231 = ssub.s32 %s25, 1
      %p232 = scmp.gt.s32.totalorder %s231, 0
      %s233 = scalar_select %p232, %s231, 0
      %p234 = scmp.lt.s32.totalorder %s24, 1
      %s235 = scalar_select %p234, %s24, 1
      %p236 = scmp.lt.s32.totalorder %s25, 1
      %s237 = scalar_select %p236, %s25, 1
      %s238 = smul.addr %s235, 2
      %s239 = sadd.s32 %s237, %s238
      %s240 = smul.addr %s239, 8
      %s241 = scalar_lea.vmem %s3, %s240
      %s242 = sld [smem:[#allocation3]]
      %s243 = sld [smem:[#allocation3 + $0x1]]
      %s244 = sadd.f32 %s242, %s243
      %s245 = sadd.f32 %s244, 0.0001
      %p246 = scmp.lt.s32.totalorder %s25, 1
      // Predicated region
      $region29: #{bifpn_concat2.1} parent=27 // pred_check
        %p247 = pneg %p246
      $region30: #{bifpn_concat2.1} parent=27 // pred_check_branch
        %249 = sbr.rel (%p247) target = $region32
      $region31: #{bifpn_concat2.1} parent=27 // pred_region
        %s250 = sld [smem:[#allocation3]]
        %v251 = vstv %s245
        %v252 = vrcp.pop %v251
        %s253 = vtos %v252
        %s254 = smul.f32 %s250, %s253
        %v255 = vld [vmem:[%s218] sm:$0xff]
        %v256 = vstv %s254
        %v257 = vmul.f32 %v256, %v255
        %258 = vst [vmem:[%s241] sm:$0xff] %v257
      $region32: #{bifpn_concat2.1} parent=27 // pred_fallthru
        _
      %p259 = scmp.ge.s32.totalorder %s25, 1
      // Predicated region
      $region33: #{bifpn_concat2.1} parent=27 // pred_check
        %p260 = pneg %p259
      $region34: #{bifpn_concat2.1} parent=27 // pred_check_branch
        %262 = sbr.rel (%p260) target = $region36
      $region35: #{bifpn_concat2.1} parent=27 // pred_region
        %s263 = sld [smem:[#allocation3 + $0x1]]
        %v264 = vstv %s245
        %v265 = vrcp.pop %v264
        %s266 = vtos %v265
        %s267 = smul.f32 %s263, %s266
        %v268 = vld [vmem:[%s230] sm:$0xff]
        %v269 = vstv %s267
        %v270 = vmul.f32 %v269, %v268
        %271 = vst [vmem:[%s241] sm:$0xff] %v270
      $region36: #{bifpn_concat2.1} parent=27 // pred_fallthru
        _
      %p272 = scmp.lt.s32.totalorder %s24, 1
      %s273 = scalar_select %p272, %s24, 1
      %p274 = scmp.lt.s32.totalorder %s25, 1
      %s275 = scalar_select %p274, %s25, 1
      %s276 = smul.addr %s273, 2
      %s277 = sadd.s32 %s275, %s276
      %s278 = smul.addr %s277, 8
      %s279 = scalar_lea.vmem %s3, %s278
      // Predicated region
      $region37: #{bifpn_concat2.1} parent=27 // pred_check
        %p280 = pneg %p118
      $region38: #{bifpn_concat2.1} parent=27 // pred_check_branch
        %282 = sbr.rel (%p280) target = $region40
      $region39: #{bifpn_concat2.1} parent=27 // pred_region
        _
      $region40: #{bifpn_concat2.1} parent=27 // pred_fallthru
        _
    $region28: #{bifpn_concat2.1} parent=5 // pred_fallthru
      _
    %p283 = scmp.le.s32.totalorder 2, %s15
    // Predicated region
    $region41: #{bifpn_concat2.1} parent=5 // pred_check
      %p284 = pneg %p283
    $region42: #{bifpn_concat2.1} parent=5 // pred_check_branch
      %286 = sbr.rel (%p284) target = $region44
    $region43: #{bifpn_concat2.1} parent=5 // pred_region
      %s287 = ssub.s32 %s15, 2
      // Predicated region
      $region45: #{bifpn_concat2.1} parent=43 // pred_check
        %p288 = pneg %p124
      $region46: #{bifpn_concat2.1} parent=43 // pred_check_branch
        %290 = sbr.rel (%p288) target = $region48
      $region47: #{bifpn_concat2.1} parent=43 // pred_region
        %p291 = scmp.lt.s32.totalorder %s26, 1
        %s292 = scalar_select %p291, %s26, 1
        %p293 = scmp.lt.s32.totalorder %s27, 1
        %s294 = scalar_select %p293, %s27, 1
        %s295 = smul.addr %s292, 2
        %s296 = sadd.s32 %s294, %s295
        %s297 = smul.addr %s296, 8
        %s298 = scalar_lea.vmem %s3, %s297
      $region48: #{bifpn_concat2.1} parent=43 // pred_fallthru
        _
    $region44: #{bifpn_concat2.1} parent=5 // pred_fallthru
      _
  $region6: #{bifpn_concat2.1} parent=0 // loop_footer
    %s19 = sadd.s32 1, %s15
  $region7: #{bifpn_concat2.1} parent=0 // loop_footer_branch
    %14 = sbr.rel target = $region3
  $region8: #{bifpn_concat2.1} parent=0 // loop_exit
    _

</llo_original>
